<compile_context>
chip_gen: v7x
topology: tpu7x:2x2x1
jax: 0.10.0
libtpu: 0.0.40
codegen_flags: <defaults>
</compile_context>

<pallas_src>
import jax
import jax.numpy as jnp
from jax.experimental import pallas as pl
from jax.experimental.pallas import tpu as pltpu

LANE = 128  # TPU vreg lane width


def _round_up(v, m):
    return (v + m - 1) // m * m


def _choose_tb(B):
    """Batch tile: big enough to amortize per-step overhead, small enough to
    give >=2 grid steps for larger batches (megacore / pipelining)."""
    if B >= 1024:
        return 512
    if B >= 256:
        return 128
    # Tiny batches: single tile, rounded up to bf16 sublane packing (16).
    return _round_up(B, 16)


def mlp_kernel(x_ref, w1_ref, b1_ref, w2_ref, b2_ref, w3_ref, b3_ref, o_ref):
    # Layer 1: Linear(n -> m1p) + ReLU   (bf16 operands, f32 accumulation)
    h = jnp.dot(x_ref[...], w1_ref[...], preferred_element_type=jnp.float32)
    h = jnp.maximum(h + b1_ref[...], 0.0).astype(jnp.bfloat16)
    # Layer 2: Linear(m1p -> m2p) + ReLU
    h = jnp.dot(h, w2_ref[...], preferred_element_type=jnp.float32)
    h = jnp.maximum(h + b2_ref[...], 0.0).astype(jnp.bfloat16)
    # Layer 3: Linear(m2p -> cp), no activation
    h = jnp.dot(h, w3_ref[...], preferred_element_type=jnp.float32)
    o_ref[...] = (h + b3_ref[...]).astype(o_ref.dtype)


def prepare_params(params):
    """One-time preprocessing: transpose, zero-pad feature dims to 128 lanes,
    cast weights to bf16.  Padding with zeros preserves exact semantics
    (padded hidden units compute relu(0)=0 and contribute nothing)."""
    (w1, b1), (w2, b2), (w3, b3) = params
    m1, n = w1.shape
    m2 = w2.shape[0]
    c = w3.shape[0]
    m1p, m2p, cp = _round_up(m1, LANE), _round_up(m2, LANE), _round_up(c, LANE)

    def pad2(a, rows, cols):
        return jnp.pad(a, ((0, rows - a.shape[0]), (0, cols - a.shape[1])))

    return {
        "w1t": pad2(w1.T, n, m1p).astype(jnp.bfloat16),    # (n,   m1p)
        "b1":  jnp.pad(b1, (0, m1p - m1)).reshape(1, m1p).astype(jnp.float32),
        "w2t": pad2(w2.T, m1p, m2p).astype(jnp.bfloat16),  # (m1p, m2p)
        "b2":  jnp.pad(b2, (0, m2p - m2)).reshape(1, m2p).astype(jnp.float32),
        "w3t": pad2(w3.T, m2p, cp).astype(jnp.bfloat16),   # (m2p, cp)
        "b3":  jnp.pad(b3, (0, cp - c)).reshape(1, cp).astype(jnp.float32),
        "c":   c,
    }


def net_forward(x, prep, *, tb=None):
    """Fused MLP forward. x: (B, n) float32; prep: output of prepare_params."""
    B, n = x.shape
    w1t, b1 = prep["w1t"], prep["b1"]
    w2t, b2 = prep["w2t"], prep["b2"]
    w3t, b3 = prep["w3t"], prep["b3"]
    c = prep["c"]
    m1p, m2p, cp = w1t.shape[1], w2t.shape[1], w3t.shape[1]

    if tb is None:
        tb = _choose_tb(B)
    Bp = _round_up(B, tb)

    xb = x.astype(jnp.bfloat16)
    if Bp != B:
        xb = jnp.pad(xb, ((0, Bp - B), (0, 0)))

    grid = (Bp // tb,)
    # VMEM budget (padded toy sizes): weights+biases ~75 KB resident,
    # double-buffered x (tb,n) bf16 and out (tb,cp) f32 tiles — far under the
    # 32 MiB scoped default on all generations (incl. v7x's 64 MiB VMEM).
    out = pl.pallas_call(
        mlp_kernel,
        out_shape=jax.ShapeDtypeStruct((Bp, cp), jnp.float32),
        grid_spec=pltpu.PrefetchScalarGridSpec(
            num_scalar_prefetch=0,
            grid=grid,
            in_specs=[
                pl.BlockSpec((tb, n), lambda i: (i, 0)),      # x tile (pipelined)
                pl.BlockSpec((n, m1p), lambda i: (0, 0)),     # W1^T (resident)
                pl.BlockSpec((1, m1p), lambda i: (0, 0)),     # b1
                pl.BlockSpec((m1p, m2p), lambda i: (0, 0)),   # W2^T (resident)
                pl.BlockSpec((1, m2p), lambda i: (0, 0)),     # b2
                pl.BlockSpec((m2p, cp), lambda i: (0, 0)),    # W3^T (resident)
                pl.BlockSpec((1, cp), lambda i: (0, 0)),      # b3
            ],
            out_specs=pl.BlockSpec((tb, cp), lambda i: (i, 0)),
        ),
        compiler_params=pltpu.CompilerParams(
            dimension_semantics=("parallel",)),
    )(xb, w1t, b1, w2t, b2, w3t, b3)
    return out[:B, :c]


def init_params(key, n, m1, m2, c):
    """Deterministic init mimicking nn.Linear's U(-1/sqrt(fan_in), 1/sqrt(fan_in))."""
    def linear(key, fan_in, fan_out):
        kw, kb = jax.random.split(key)
        bound = 1.0 / jnp.sqrt(fan_in)
        w = jax.random.uniform(kw, (fan_out, fan_in), jnp.float32, -bound, bound)
        b = jax.random.uniform(kb, (fan_out,), jnp.float32, -bound, bound)
        return w, b

    k1, k2, k3 = jax.random.split(key, 3)
    return (linear(k1, n, m1), linear(k2, m1, m2), linear(k3, m2, c))


def net_forward_ref(x, params):
    """Pure-JAX f32 reference (PyTorch semantics) for correctness check."""
    (w1, b1), (w2, b2), (w3, b3) = params
    h = jnp.maximum(x @ w1.T + b1, 0.0)
    h = jnp.maximum(h @ w2.T + b2, 0.0)
    return h @ w3.T + b3


if __name__ == "__main__":
    # Net(n=32, m1=64, m2=32, c=10); batch large enough to give a 2-step grid.
    n, m1, m2, c = 32, 64, 32, 10
    B = 256

    key = jax.random.PRNGKey(0)
    kx, kp = jax.random.split(key)
    x = jax.random.normal(kx, (B, n), jnp.float32)
    params = init_params(kp, n, m1, m2, c)

    prep = prepare_params(params)            # one-time weight preprocessing
    out = net_forward(x, prep)
    out = jax.block_until_ready(out)

    ref = net_forward_ref(x, params)
    assert out.shape == (B, c), out.shape
    # bf16 operands with f32 accumulation: compare to f32 reference at bf16
    # precision level.
    assert jnp.allclose(out, ref, atol=5e-2, rtol=5e-2), float(
        jnp.max(jnp.abs(out - ref)))

    print("KERNEL_OK")
</pallas_src>

<mosaic_0001>
module attributes {stable_mosaic.version = 11 : i64} {
  func.func @mlp_kernel(%arg0: i32, %arg1: memref<128x32xbf16, #tpu.memory_space<vmem>>, %arg2: memref<32x128xbf16, #tpu.memory_space<vmem>>, %arg3: memref<1x128xf32, #tpu.memory_space<vmem>>, %arg4: memref<128x128xbf16, #tpu.memory_space<vmem>>, %arg5: memref<1x128xf32, #tpu.memory_space<vmem>>, %arg6: memref<128x128xbf16, #tpu.memory_space<vmem>>, %arg7: memref<1x128xf32, #tpu.memory_space<vmem>>, %arg8: memref<128x128xf32, #tpu.memory_space<vmem>>) attributes {dimension_semantics = [#tpu.dimension_semantics<parallel>], iteration_bounds = array<i64: 2>, scalar_prefetch = 0 : i64, scratch_operands = 0 : i64, tpu.core_type = #tpu.core_type<tc>, window_params = [{transform_indices = @transform_0, window_bounds = array<i64: 128, 32>}, {pipeline_mode = #tpu.pipeline_mode<synchronous>, transform_indices = @transform_1, window_bounds = array<i64: 32, 128>}, {pipeline_mode = #tpu.pipeline_mode<synchronous>, transform_indices = @transform_2, window_bounds = array<i64: 1, 128>}, {pipeline_mode = #tpu.pipeline_mode<synchronous>, transform_indices = @transform_3, window_bounds = array<i64: 128, 128>}, {pipeline_mode = #tpu.pipeline_mode<synchronous>, transform_indices = @transform_4, window_bounds = array<i64: 1, 128>}, {pipeline_mode = #tpu.pipeline_mode<synchronous>, transform_indices = @transform_5, window_bounds = array<i64: 128, 128>}, {pipeline_mode = #tpu.pipeline_mode<synchronous>, transform_indices = @transform_6, window_bounds = array<i64: 1, 128>}, {transform_indices = @transform_7, window_bounds = array<i64: 128, 128>}]} {
    %c0 = arith.constant 0 : index
    %c0_0 = arith.constant 0 : index
    %0 = vector.load %arg1[%c0, %c0_0] : memref<128x32xbf16, #tpu.memory_space<vmem>>, vector<128x32xbf16>
    %c0_1 = arith.constant 0 : index
    %c0_2 = arith.constant 0 : index
    %1 = vector.load %arg2[%c0_1, %c0_2] : memref<32x128xbf16, #tpu.memory_space<vmem>>, vector<32x128xbf16>
    %cst = arith.constant dense<0.000000e+00> : vector<128x128xf32>
    %2 = tpu.matmul %0, %1, %cst {dimension_numbers = #tpu.dot_dimension_numbers<[1], [0], [0], [1], [0, 0, 1, 1], [], []>} : vector<128x32xbf16>, vector<32x128xbf16>, vector<128x128xf32> -> vector<128x128xf32>
    %c0_3 = arith.constant 0 : index
    %c0_4 = arith.constant 0 : index
    %3 = vector.load %arg3[%c0_3, %c0_4] : memref<1x128xf32, #tpu.memory_space<vmem>>, vector<1x128xf32>
    %4 = vector.broadcast %3 : vector<1x128xf32> to vector<128x128xf32>
    %5 = arith.addf %2, %4 : vector<128x128xf32>
    %cst_5 = arith.constant 0.000000e+00 : f32
    %6 = vector.broadcast %cst_5 : f32 to vector<128x128xf32>
    %7 = arith.maximumf %5, %6 : vector<128x128xf32>
    %8 = arith.truncf %7 : vector<128x128xf32> to vector<128x128xbf16>
    %c0_6 = arith.constant 0 : index
    %c0_7 = arith.constant 0 : index
    %9 = vector.load %arg4[%c0_6, %c0_7] : memref<128x128xbf16, #tpu.memory_space<vmem>>, vector<128x128xbf16>
    %cst_8 = arith.constant dense<0.000000e+00> : vector<128x128xf32>
    %10 = tpu.matmul %8, %9, %cst_8 {dimension_numbers = #tpu.dot_dimension_numbers<[1], [0], [0], [1], [0, 0, 1, 1], [], []>} : vector<128x128xbf16>, vector<128x128xbf16>, vector<128x128xf32> -> vector<128x128xf32>
    %c0_9 = arith.constant 0 : index
    %c0_10 = arith.constant 0 : index
    %11 = vector.load %arg5[%c0_9, %c0_10] : memref<1x128xf32, #tpu.memory_space<vmem>>, vector<1x128xf32>
    %12 = vector.broadcast %11 : vector<1x128xf32> to vector<128x128xf32>
    %13 = arith.addf %10, %12 : vector<128x128xf32>
    %cst_11 = arith.constant 0.000000e+00 : f32
    %14 = vector.broadcast %cst_11 : f32 to vector<128x128xf32>
    %15 = arith.maximumf %13, %14 : vector<128x128xf32>
    %16 = arith.truncf %15 : vector<128x128xf32> to vector<128x128xbf16>
    %c0_12 = arith.constant 0 : index
    %c0_13 = arith.constant 0 : index
    %17 = vector.load %arg6[%c0_12, %c0_13] : memref<128x128xbf16, #tpu.memory_space<vmem>>, vector<128x128xbf16>
    %cst_14 = arith.constant dense<0.000000e+00> : vector<128x128xf32>
    %18 = tpu.matmul %16, %17, %cst_14 {dimension_numbers = #tpu.dot_dimension_numbers<[1], [0], [0], [1], [0, 0, 1, 1], [], []>} : vector<128x128xbf16>, vector<128x128xbf16>, vector<128x128xf32> -> vector<128x128xf32>
    %c0_15 = arith.constant 0 : index
    %c0_16 = arith.constant 0 : index
    %19 = vector.load %arg7[%c0_15, %c0_16] : memref<1x128xf32, #tpu.memory_space<vmem>>, vector<1x128xf32>
    %20 = vector.broadcast %19 : vector<1x128xf32> to vector<128x128xf32>
    %21 = arith.addf %18, %20 : vector<128x128xf32>
    %c0_17 = arith.constant 0 : index
    %c0_18 = arith.constant 0 : index
    %22 = vector.load %arg8[%c0_17, %c0_18] : memref<128x128xf32, #tpu.memory_space<vmem>>, vector<128x128xf32>
    tpu.vector_store %arg8[%c0_17, %c0_18], %21 {strides = array<i32>} : memref<128x128xf32, #tpu.memory_space<vmem>>, vector<128x128xf32>,
    return
  }
  func.func @transform_0(%arg0: i32) -> (i32, i32) {
    %c0_i32 = arith.constant 0 : i32
    %c0_i32_0 = arith.constant 0 : i32
    return %arg0, %c0_i32 : i32, i32
  }
  func.func @transform_1(%arg0: i32) -> (i32, i32) {
    %c0_i32 = arith.constant 0 : i32
    %c0_i32_0 = arith.constant 0 : i32
    %c0_i32_1 = arith.constant 0 : i32
    return %c0_i32, %c0_i32_0 : i32, i32
  }
  func.func @transform_2(%arg0: i32) -> (i32, i32) {
    %c0_i32 = arith.constant 0 : i32
    %c0_i32_0 = arith.constant 0 : i32
    %c0_i32_1 = arith.constant 0 : i32
    return %c0_i32, %c0_i32_0 : i32, i32
  }
  func.func @transform_3(%arg0: i32) -> (i32, i32) {
    %c0_i32 = arith.constant 0 : i32
    %c0_i32_0 = arith.constant 0 : i32
    %c0_i32_1 = arith.constant 0 : i32
    return %c0_i32, %c0_i32_0 : i32, i32
  }
  func.func @transform_4(%arg0: i32) -> (i32, i32) {
    %c0_i32 = arith.constant 0 : i32
    %c0_i32_0 = arith.constant 0 : i32
    %c0_i32_1 = arith.constant 0 : i32
    return %c0_i32, %c0_i32_0 : i32, i32
  }
  func.func @transform_5(%arg0: i32) -> (i32, i32) {
    %c0_i32 = arith.constant 0 : i32
    %c0_i32_0 = arith.constant 0 : i32
    %c0_i32_1 = arith.constant 0 : i32
    return %c0_i32, %c0_i32_0 : i32, i32
  }
  func.func @transform_6(%arg0: i32) -> (i32, i32) {
    %c0_i32 = arith.constant 0 : i32
    %c0_i32_0 = arith.constant 0 : i32
    %c0_i32_1 = arith.constant 0 : i32
    return %c0_i32, %c0_i32_0 : i32, i32
  }
  func.func @transform_7(%arg0: i32) -> (i32, i32) {
    %c0_i32 = arith.constant 0 : i32
    %c0_i32_0 = arith.constant 0 : i32
    return %arg0, %c0_i32 : i32, i32
  }
}

</mosaic_0001>

<llo_original>
// kernel: tpu_custom_call.1
$region0: #{tpu_custom_call.1}
  #allocation0 [shape = 'u32[]', space=smem, size = 0x4, offset = 0x4, fixed_abs, tag = 'smem constant byte address 0x4 - core index']
  #allocation1 [shape = 'u32[144,128]{1,0:T(1,128)}', space=vmem, size = 0x12000, scoped, tag = 'internal scratch']
  %s0 = inlined_call_operand.vmem [shape: bf16[256,32], index: 0, kind: input, shape index: {}]
  %s1 = inlined_call_operand.vmem [shape: bf16[32,128], index: 1, kind: input, shape index: {}]
  %s2 = inlined_call_operand.vmem [shape: f32[1,128], index: 2, kind: input, shape index: {}]
  %s3 = inlined_call_operand.vmem [shape: bf16[128,128], index: 3, kind: input, shape index: {}]
  %s4 = inlined_call_operand.vmem [shape: f32[1,128], index: 4, kind: input, shape index: {}]
  %s5 = inlined_call_operand.vmem [shape: bf16[128,128], index: 5, kind: input, shape index: {}]
  %s6 = inlined_call_operand.vmem [shape: f32[1,128], index: 6, kind: input, shape index: {}]
  %s7 = inlined_call_operand.hbm [shape: f32[256,128], index: 7, kind: output, shape index: {}]
  %s8 = sld [smem:[#allocation0]]
  $region61: #{tpu_custom_call.1} parent=0
    _
  %s10 = ssub.s32 1, %s8
  %s11 = scalar_select 0, %s10, %s8
  $region1: #{tpu_custom_call.1} parent=0
    #allocation2 [shape = 'u8[131072]{0}', space=vmem, size = 0x20000, scoped, tag = 'output window, operand 0']
    #allocation3 [shape = 's32[2]{0}', space=sflag, size = 0x8, scoped, tag = 'scoped memory for tpu_custom_call.1']
    %12 = vsyncpa [#allocation3], 0
    %s13 = scalar_lea.sflag [#allocation3], 1
    %14 = vsyncpa %s13, 0
    loop: start=0, step=1, limit=4
    $region2: #{tpu_custom_call.1} parent=1 // loop_pre_header
      _
    $region3: #{tpu_custom_call.1} parent=1 // loop_header
      %s16 = sphi 0, %s20
      %p17 = scmp.ge.s32.totalorder %s16, 4
      %s26 = sphi 0, %s28
      %s29 = sphi 0, %s26
      %s30 = sphi 0, %s29
      %s46 = sphi 0, %s30
      %s50 = sphi 0, %s50
      %s52 = sphi 0, %s50
      %s53 = sphi 0, %s52
      %s67 = sphi 0, %s53
      %s71 = sphi 0, %s71
      %s73 = sphi 0, %s71
      %s74 = sphi 0, %s73
      %s88 = sphi 0, %s74
      %s92 = sphi 0, %s92
      %s94 = sphi 0, %s92
      %s95 = sphi 0, %s94
      %s109 = sphi 0, %s95
      %s113 = sphi 0, %s113
      %s115 = sphi 0, %s113
      %s116 = sphi 0, %s115
      %s130 = sphi 0, %s116
      %s134 = sphi 0, %s134
      %s136 = sphi 0, %s134
      %s137 = sphi 0, %s136
      %s151 = sphi 0, %s137
      %s155 = sphi 0, %s155
      %s157 = sphi 0, %s155
      %s158 = sphi 0, %s157
      %s172 = sphi 0, %s158
      %s178 = sphi 0, %s180
      %s181 = sphi 0, %s178
      %s182 = sphi 0, %s181
      %s198 = sphi 0, %s182
    $region4: #{tpu_custom_call.1} parent=1 // loop_header_branch
      %19 = sbr.rel (%p17) target = $region8
    $region5: #{tpu_custom_call.1} parent=1 // loop_body
      %s21 = ssub.s32 %s16, 1
      %s22 = ssub.s32 %s16, 2
      %s23 = sadd.s32 %s16, 1
      %s24 = ssub.s32 %s16, %s23
      %p25 = scmp.eq.s32.totalorder %s24, 0
      %s27 = sadd.s32 %s26, 1
      %s28 = scalar_select %p25, %s26, %s27
      %p31 = pneg %p25
      %p32 = scmp.eq.s32.totalorder %s16, 1
      %p33 = por %p31, %p32
      %p34 = scmp.ne.s32.totalorder %s26, %s29
      %p35 = scmp.eq.s32.totalorder %s16, 0
      %p36 = por %p34, %p35
      %p37 = scmp.ne.s32.totalorder %s26, %s29
      %p38 = scmp.eq.s32.totalorder %s21, 1
      %p39 = por %p37, %p38
      %p40 = scmp.ne.s32.totalorder %s29, %s30
      %p41 = scmp.eq.s32.totalorder %s21, 0
      %p42 = por %p40, %p41
      %p43 = scmp.ne.s32.totalorder %s29, %s30
      %p44 = scmp.eq.s32.totalorder %s22, 1
      %p45 = por %p43, %p44
      %p47 = scmp.ne.s32.totalorder %s30, %s46
      %p48 = scmp.eq.s32.totalorder %s22, 0
      %p49 = por %p47, %p48
      %s51 = sadd.s32 %s50, 1
      %p54 = scmp.eq.s32.totalorder %s16, 1
      %p55 = scmp.ne.s32.totalorder %s50, %s52
      %p56 = scmp.eq.s32.totalorder %s16, 0
      %p57 = por %p55, %p56
      %p58 = scmp.ne.s32.totalorder %s50, %s52
      %p59 = scmp.eq.s32.totalorder %s21, 1
      %p60 = por %p58, %p59
      %p61 = scmp.ne.s32.totalorder %s52, %s53
      %p62 = scmp.eq.s32.totalorder %s21, 0
      %p63 = por %p61, %p62
      %p64 = scmp.ne.s32.totalorder %s52, %s53
      %p65 = scmp.eq.s32.totalorder %s22, 1
      %p66 = por %p64, %p65
      %p68 = scmp.ne.s32.totalorder %s53, %s67
      %p69 = scmp.eq.s32.totalorder %s22, 0
      %p70 = por %p68, %p69
      %s72 = sadd.s32 %s71, 1
      %p75 = scmp.eq.s32.totalorder %s16, 1
      %p76 = scmp.ne.s32.totalorder %s71, %s73
      %p77 = scmp.eq.s32.totalorder %s16, 0
      %p78 = por %p76, %p77
      %p79 = scmp.ne.s32.totalorder %s71, %s73
      %p80 = scmp.eq.s32.totalorder %s21, 1
      %p81 = por %p79, %p80
      %p82 = scmp.ne.s32.totalorder %s73, %s74
      %p83 = scmp.eq.s32.totalorder %s21, 0
      %p84 = por %p82, %p83
      %p85 = scmp.ne.s32.totalorder %s73, %s74
      %p86 = scmp.eq.s32.totalorder %s22, 1
      %p87 = por %p85, %p86
      %p89 = scmp.ne.s32.totalorder %s74, %s88
      %p90 = scmp.eq.s32.totalorder %s22, 0
      %p91 = por %p89, %p90
      %s93 = sadd.s32 %s92, 1
      %p96 = scmp.eq.s32.totalorder %s16, 1
      %p97 = scmp.ne.s32.totalorder %s92, %s94
      %p98 = scmp.eq.s32.totalorder %s16, 0
      %p99 = por %p97, %p98
      %p100 = scmp.ne.s32.totalorder %s92, %s94
      %p101 = scmp.eq.s32.totalorder %s21, 1
      %p102 = por %p100, %p101
      %p103 = scmp.ne.s32.totalorder %s94, %s95
      %p104 = scmp.eq.s32.totalorder %s21, 0
      %p105 = por %p103, %p104
      %p106 = scmp.ne.s32.totalorder %s94, %s95
      %p107 = scmp.eq.s32.totalorder %s22, 1
      %p108 = por %p106, %p107
      %p110 = scmp.ne.s32.totalorder %s95, %s109
      %p111 = scmp.eq.s32.totalorder %s22, 0
      %p112 = por %p110, %p111
      %s114 = sadd.s32 %s113, 1
      %p117 = scmp.eq.s32.totalorder %s16, 1
      %p118 = scmp.ne.s32.totalorder %s113, %s115
      %p119 = scmp.eq.s32.totalorder %s16, 0
      %p120 = por %p118, %p119
      %p121 = scmp.ne.s32.totalorder %s113, %s115
      %p122 = scmp.eq.s32.totalorder %s21, 1
      %p123 = por %p121, %p122
      %p124 = scmp.ne.s32.totalorder %s115, %s116
      %p125 = scmp.eq.s32.totalorder %s21, 0
      %p126 = por %p124, %p125
      %p127 = scmp.ne.s32.totalorder %s115, %s116
      %p128 = scmp.eq.s32.totalorder %s22, 1
      %p129 = por %p127, %p128
      %p131 = scmp.ne.s32.totalorder %s116, %s130
      %p132 = scmp.eq.s32.totalorder %s22, 0
      %p133 = por %p131, %p132
      %s135 = sadd.s32 %s134, 1
      %p138 = scmp.eq.s32.totalorder %s16, 1
      %p139 = scmp.ne.s32.totalorder %s134, %s136
      %p140 = scmp.eq.s32.totalorder %s16, 0
      %p141 = por %p139, %p140
      %p142 = scmp.ne.s32.totalorder %s134, %s136
      %p143 = scmp.eq.s32.totalorder %s21, 1
      %p144 = por %p142, %p143
      %p145 = scmp.ne.s32.totalorder %s136, %s137
      %p146 = scmp.eq.s32.totalorder %s21, 0
      %p147 = por %p145, %p146
      %p148 = scmp.ne.s32.totalorder %s136, %s137
      %p149 = scmp.eq.s32.totalorder %s22, 1
      %p150 = por %p148, %p149
      %p152 = scmp.ne.s32.totalorder %s137, %s151
      %p153 = scmp.eq.s32.totalorder %s22, 0
      %p154 = por %p152, %p153
      %s156 = sadd.s32 %s155, 1
      %p159 = scmp.eq.s32.totalorder %s16, 1
      %p160 = scmp.ne.s32.totalorder %s155, %s157
      %p161 = scmp.eq.s32.totalorder %s16, 0
      %p162 = por %p160, %p161
      %p163 = scmp.ne.s32.totalorder %s155, %s157
      %p164 = scmp.eq.s32.totalorder %s21, 1
      %p165 = por %p163, %p164
      %p166 = scmp.ne.s32.totalorder %s157, %s158
      %p167 = scmp.eq.s32.totalorder %s21, 0
      %p168 = por %p166, %p167
      %p169 = scmp.ne.s32.totalorder %s157, %s158
      %p170 = scmp.eq.s32.totalorder %s22, 1
      %p171 = por %p169, %p170
      %p173 = scmp.ne.s32.totalorder %s158, %s172
      %p174 = scmp.eq.s32.totalorder %s22, 0
      %p175 = por %p173, %p174
      %s176 = ssub.s32 %s16, %s23
      %p177 = scmp.eq.s32.totalorder %s176, 0
      %s179 = sadd.s32 %s178, 1
      %s180 = scalar_select %p177, %s178, %s179
      %p183 = pneg %p177
      %p184 = scmp.eq.s32.totalorder %s16, 1
      %p185 = por %p183, %p184
      %p186 = scmp.ne.s32.totalorder %s178, %s181
      %p187 = scmp.eq.s32.totalorder %s16, 0
      %p188 = por %p186, %p187
      %p189 = scmp.ne.s32.totalorder %s178, %s181
      %p190 = scmp.eq.s32.totalorder %s21, 1
      %p191 = por %p189, %p190
      %p192 = scmp.ne.s32.totalorder %s181, %s182
      %p193 = scmp.eq.s32.totalorder %s21, 0
      %p194 = por %p192, %p193
      %p195 = scmp.ne.s32.totalorder %s181, %s182
      %p196 = scmp.eq.s32.totalorder %s22, 1
      %p197 = por %p195, %p196
      %p199 = scmp.ne.s32.totalorder %s182, %s198
      %p200 = scmp.eq.s32.totalorder %s22, 0
      %p201 = por %p199, %p200
      %p202 = scmp.le.s32.totalorder 1, %s16
      %p203 = scmp.lt.s32.totalorder %s16, 3
      %p204 = pnand %p202, %p203
      %p205 = pneg %p204
      // Predicated region
      $region9: #{tpu_custom_call.1} parent=5 // pred_check
        _
      $region10: #{tpu_custom_call.1} parent=5 // pred_check_branch
        %207 = sbr.rel (%p204) target = $region12
      $region11: #{tpu_custom_call.1} parent=5 // pred_region
        %s208 = ssub.s32 %s16, 1
        // Predicated region
        $region13: #{tpu_custom_call.1} parent=11 // pred_check
          %p209 = pneg %p63
        $region14: #{tpu_custom_call.1} parent=11 // pred_check_branch
          %211 = sbr.rel (%p209) target = $region16
        $region15: #{tpu_custom_call.1} parent=11 // pred_region
          _
        $region16: #{tpu_custom_call.1} parent=11 // pred_fallthru
          _
        // Predicated region
        $region17: #{tpu_custom_call.1} parent=11 // pred_check
          %p212 = pneg %p84
        $region18: #{tpu_custom_call.1} parent=11 // pred_check_branch
          %214 = sbr.rel (%p212) target = $region20
        $region19: #{tpu_custom_call.1} parent=11 // pred_region
          _
        $region20: #{tpu_custom_call.1} parent=11 // pred_fallthru
          _
        // Predicated region
        $region21: #{tpu_custom_call.1} parent=11 // pred_check
          %p215 = pneg %p105
        $region22: #{tpu_custom_call.1} parent=11 // pred_check_branch
          %217 = sbr.rel (%p215) target = $region24
        $region23: #{tpu_custom_call.1} parent=11 // pred_region
          _
        $region24: #{tpu_custom_call.1} parent=11 // pred_fallthru
          _
        // Predicated region
        $region25: #{tpu_custom_call.1} parent=11 // pred_check
          %p218 = pneg %p126
        $region26: #{tpu_custom_call.1} parent=11 // pred_check_branch
          %220 = sbr.rel (%p218) target = $region28
        $region27: #{tpu_custom_call.1} parent=11 // pred_region
          _
        $region28: #{tpu_custom_call.1} parent=11 // pred_fallthru
          _
        // Predicated region
        $region29: #{tpu_custom_call.1} parent=11 // pred_check
          %p221 = pneg %p147
        $region30: #{tpu_custom_call.1} parent=11 // pred_check_branch
          %223 = sbr.rel (%p221) target = $region32
        $region31: #{tpu_custom_call.1} parent=11 // pred_region
          _
        $region32: #{tpu_custom_call.1} parent=11 // pred_fallthru
          _
        // Predicated region
        $region33: #{tpu_custom_call.1} parent=11 // pred_check
          %p224 = pneg %p168
        $region34: #{tpu_custom_call.1} parent=11 // pred_check_branch
          %226 = sbr.rel (%p224) target = $region36
        $region35: #{tpu_custom_call.1} parent=11 // pred_region
          _
        $region36: #{tpu_custom_call.1} parent=11 // pred_fallthru
          _
      $region12: #{tpu_custom_call.1} parent=5 // pred_fallthru
        _
      %p227 = scmp.lt.s32.totalorder %s16, 2
      // Predicated region
      $region37: #{tpu_custom_call.1} parent=5 // pred_check
        %p228 = pneg %p227
      $region38: #{tpu_custom_call.1} parent=5 // pred_check_branch
        %230 = sbr.rel (%p228) target = $region40
      $region39: #{tpu_custom_call.1} parent=5 // pred_region
        // Predicated region
        $region41: #{tpu_custom_call.1} parent=39 // pred_check
          %p231 = pneg %p36
        $region42: #{tpu_custom_call.1} parent=39 // pred_check_branch
          %233 = sbr.rel (%p231) target = $region44
        $region43: #{tpu_custom_call.1} parent=39 // pred_region
          %s234 = smul.u32 16, %s16
          %p235 = scmp.lt.s32.totalorder %s234, 31
          %s236 = scalar_select %p235, %s234, 31
          %s237 = smul.addr %s236, 4
          %s238 = scalar_lea.vmem %s0, %s237
          %s239 = smul.u32 16, %s16
        $region44: #{tpu_custom_call.1} parent=39 // pred_fallthru
          _
      $region40: #{tpu_custom_call.1} parent=5 // pred_fallthru
        _
      %p240 = scmp.le.s32.totalorder 1, %s16
      %p241 = scmp.lt.s32.totalorder %s16, 3
      %p242 = pnand %p240, %p241
      %p243 = pneg %p242
      // Predicated region
      $region45: #{tpu_custom_call.1} parent=5 // pred_check
        _
      $region46: #{tpu_custom_call.1} parent=5 // pred_check_branch
        %245 = sbr.rel (%p242) target = $region48
      $region47: #{tpu_custom_call.1} parent=5 // pred_region
        %s246 = ssub.s32 %s16, 1
        %s247 = smul.u32 16, %s21
        %p248 = scmp.lt.s32.totalorder %s247, 31
        %s249 = scalar_select %p248, %s247, 31
        %s250 = smul.addr %s249, 4
        %s251 = scalar_lea.vmem %s0, %s250
        %p252 = pneg %p42
        %p253 = pneg %p39
        %p254 = pneg %p63
        %p255 = pneg %p60
        %p256 = pneg %p84
        %p257 = pneg %p81
        %p258 = pneg %p105
        %p259 = pneg %p102
        %p260 = pneg %p126
        %p261 = pneg %p123
        %p262 = pneg %p147
        %p263 = pneg %p144
        %p264 = pneg %p168
        %p265 = pneg %p165
        %p266 = pneg %p194
        %p267 = pneg %p191
        %s268 = sand.u32 %s181, 1
        %s269 = scalar_lea.sflag [#allocation3], %s268
        %s270 = sand.u32 %s181, 1
        %s271 = smul.addr %s270, 128
        %s272 = scalar_lea.vmem [#allocation2], %s271
        %s273 = smul.u32 16, %s21
        %p274 = scmp.lt.s32.totalorder %s273, 31
        %s275 = scalar_select %p274, %s273, 31
        %s276 = smul.addr %s275, 4
        %s277 = scalar_lea.vmem %s0, %s276
        %s278 = smul.u32 16, %s21
        %s279 = smul.u32 16, %s21
        %v281 = vld [vmem:[%s277] sm:$0xf]
        %v282 = vld [vmem:[%s277 + $0x4] sm:$0xf]
        %v283 = vld [vmem:[%s277 + $0x8] sm:$0xf]
        %v284 = vld [vmem:[%s277 + $0xc] sm:$0xf]
        %v285 = vld [vmem:[%s277 + $0x10] sm:$0xf]
        %v286 = vld [vmem:[%s277 + $0x14] sm:$0xf]
        %v287 = vld [vmem:[%s277 + $0x18] sm:$0xf]
        %v288 = vld [vmem:[%s277 + $0x1c] sm:$0xf]
        %v289 = vld [vmem:[%s277 + $0x20] sm:$0xf]
        %v290 = vld [vmem:[%s277 + $0x24] sm:$0xf]
        %v291 = vld [vmem:[%s277 + $0x28] sm:$0xf]
        %v292 = vld [vmem:[%s277 + $0x2c] sm:$0xf]
        %v293 = vld [vmem:[%s277 + $0x30] sm:$0xf]
        %v294 = vld [vmem:[%s277 + $0x34] sm:$0xf]
        %v295 = vld [vmem:[%s277 + $0x38] sm:$0xf]
        %v296 = vld [vmem:[%s277 + $0x3c] sm:$0xf]
        %v297 = vld [vmem:[%s1] sm:$0xf]
        %v298 = vld [vmem:[%s1 + $0x4] sm:$0xf]
        %v299 = vld [vmem:[%s1 + $0x8] sm:$0xf]
        %v300 = vld [vmem:[%s1 + $0xc] sm:$0xf]
        %v301 = vld [vmem:[%s2] sm:$0x1]
        %v303 = vlaneseq
        %v304 = vshrl.u32 %v303, 7
        %v305 = vsub.s32 0, %v304
        %v306 = vrot.slane %v301, %v305
        %v324 = vunpack.c.l.b16 %v281
        %v325 = vunpack.c.l.b16 %v282
        %v326 = vunpack.c.l.b16 %v283
        %v327 = vunpack.c.l.b16 %v284
        %v328 = vunpack.c.l.b16 %v285
        %v329 = vunpack.c.l.b16 %v286
        %v330 = vunpack.c.l.b16 %v287
        %v331 = vunpack.c.l.b16 %v288
        %v332 = vunpack.c.l.b16 %v289
        %v333 = vunpack.c.l.b16 %v290
        %v334 = vunpack.c.l.b16 %v291
        %v335 = vunpack.c.l.b16 %v292
        %v336 = vunpack.c.l.b16 %v293
        %v337 = vunpack.c.l.b16 %v294
        %v338 = vunpack.c.l.b16 %v295
        %v339 = vunpack.c.l.b16 %v296
        %v340 = vpack.c.b16 %v325, %v324
        %v341 = vpack.c.b16 %v327, %v326
        %v342 = vpack.c.b16 %v329, %v328
        %v343 = vpack.c.b16 %v331, %v330
        %v344 = vpack.c.b16 %v333, %v332
        %v345 = vpack.c.b16 %v335, %v334
        %v346 = vpack.c.b16 %v337, %v336
        %v347 = vpack.c.b16 %v339, %v338
        %v352 = vunpack.c.l.b16 %v297
        %v353 = vunpack.c.l.b16 %v298
        %v354 = vunpack.c.l.b16 %v299
        %v355 = vunpack.c.l.b16 %v300
        %v356 = vpack.c.b16 %v353, %v352
        %v357 = vpack.c.b16 %v355, %v354
        %vm360 = vcmask 261120
        %v362 = vsel %vm360, %v340, 0
        %v365 = vsel %vm360, %v341, 0
        %v368 = vsel %vm360, %v342, 0
        %v371 = vsel %vm360, %v343, 0
        %v374 = vsel %vm360, %v344, 0
        %v377 = vsel %vm360, %v345, 0
        %v380 = vsel %vm360, %v346, 0
        %v383 = vsel %vm360, %v347, 0
        %385 = vmatprep.subr.bf16.mxu0 0
        %386 = vmatpush1.bf16.msra.mxu0 %v356
        %387 = vmatprep.subr.bf16.mxu0 0
        %388 = vmatpush1.bf16.msra.mxu0 %v357
        %389 = vmatprep.subr.bf16.mxu0 0
        %390 = vmatpush1.bf16.msra.mxu0 0
        %391 = vmatprep.subr.bf16.mxu0 0
        %392 = vmatpush1.bf16.msra.mxu0 0
        %393 = vmatprep.subr.bf16.mxu0 0
        %394 = vmatpush1.bf16.msra.mxu0 0
        %395 = vmatprep.subr.bf16.mxu0 0
        %396 = vmatpush1.bf16.msra.mxu0 0
        %397 = vmatprep.subr.bf16.mxu0 0
        %398 = vmatpush1.bf16.msra.mxu0 0
        %399 = vmatprep.subr.bf16.mxu0 0
        %400 = vmatpush1.bf16.msra.mxu0 0
        %401 = vmatprep.subr.bf16.mxu0 0
        %402 = vmatpush1.bf16.msra.mxu0 0
        %403 = vmatprep.subr.bf16.mxu0 0
        %404 = vmatpush1.bf16.msra.mxu0 0
        %405 = vmatprep.subr.bf16.mxu0 0
        %406 = vmatpush1.bf16.msra.mxu0 0
        %407 = vmatprep.subr.bf16.mxu0 0
        %408 = vmatpush1.bf16.msra.mxu0 0
        %409 = vmatprep.subr.bf16.mxu0 0
        %410 = vmatpush1.bf16.msra.mxu0 0
        %411 = vmatprep.subr.bf16.mxu0 0
        %412 = vmatpush1.bf16.msra.mxu0 0
        %413 = vmatprep.subr.bf16.mxu0 0
        %414 = vmatpush1.bf16.msra.mxu0 0
        %415 = vmatprep.subr.bf16.mxu0 0
        %416 = vmatpush1.bf16.msra.mxu0 0
        %417 = vmatprep.mubr.bf16.mxu0 0
        %418 = vmatmul.mubr.bf16.gmra.mrb[0].mxu0 %v362
        %v419 = vpop.f32.mrb[0].mxu0
        %v420 = vadd.f32 %v306, %v419
        %v421 = vpop.f32.mrb[0].mxu0
        %v422 = vpop.f32.mrb[0].mxu0
        %v423 = vadd.f32 %v306, %v422
        %v424 = vpop.f32.mrb[0].mxu0
        %425 = vmatprep.mubr.bf16.mxu0 0
        %426 = vmatmul.mubr.bf16.gmra.mrb[0].mxu0 %v365
        %v427 = vpop.f32.mrb[0].mxu0
        %v428 = vadd.f32 %v306, %v427
        %v429 = vpop.f32.mrb[0].mxu0
        %v430 = vpop.f32.mrb[0].mxu0
        %v431 = vadd.f32 %v306, %v430
        %v432 = vpop.f32.mrb[0].mxu0
        %433 = vmatprep.mubr.bf16.mxu0 0
        %434 = vmatmul.mubr.bf16.gmra.mrb[0].mxu0 %v368
        %v435 = vpop.f32.mrb[0].mxu0
        %v436 = vadd.f32 %v306, %v435
        %v437 = vpop.f32.mrb[0].mxu0
        %v438 = vpop.f32.mrb[0].mxu0
        %v439 = vadd.f32 %v306, %v438
        %v440 = vpop.f32.mrb[0].mxu0
        %441 = vmatprep.mubr.bf16.mxu0 0
        %442 = vmatmul.mubr.bf16.gmra.mrb[0].mxu0 %v371
        %v443 = vpop.f32.mrb[0].mxu0
        %v444 = vadd.f32 %v306, %v443
        %v445 = vpop.f32.mrb[0].mxu0
        %v446 = vpop.f32.mrb[0].mxu0
        %v447 = vadd.f32 %v306, %v446
        %v448 = vpop.f32.mrb[0].mxu0
        %449 = vmatprep.mubr.bf16.mxu0 0
        %450 = vmatmul.mubr.bf16.gmra.mrb[0].mxu0 %v374
        %v451 = vpop.f32.mrb[0].mxu0
        %v452 = vadd.f32 %v306, %v451
        %v453 = vpop.f32.mrb[0].mxu0
        %v454 = vpop.f32.mrb[0].mxu0
        %v455 = vadd.f32 %v306, %v454
        %v456 = vpop.f32.mrb[0].mxu0
        %457 = vmatprep.mubr.bf16.mxu0 0
        %458 = vmatmul.mubr.bf16.gmra.mrb[0].mxu0 %v377
        %v459 = vpop.f32.mrb[0].mxu0
        %v460 = vadd.f32 %v306, %v459
        %v461 = vpop.f32.mrb[0].mxu0
        %v462 = vpop.f32.mrb[0].mxu0
        %v463 = vadd.f32 %v306, %v462
        %v464 = vpop.f32.mrb[0].mxu0
        %465 = vmatprep.mubr.bf16.mxu0 0
        %466 = vmatmul.mubr.bf16.gmra.mrb[0].mxu0 %v380
        %v467 = vpop.f32.mrb[0].mxu0
        %v468 = vadd.f32 %v306, %v467
        %v469 = vpop.f32.mrb[0].mxu0
        %v470 = vpop.f32.mrb[0].mxu0
        %v471 = vadd.f32 %v306, %v470
        %v472 = vpop.f32.mrb[0].mxu0
        %473 = vmatprep.mubr.bf16.mxu0 0
        %474 = vmatmul.mubr.bf16.gmra.mrb[0].mxu0 %v383
        %v475 = vpop.f32.mrb[0].mxu0
        %v476 = vadd.f32 %v306, %v475
        %v477 = vpop.f32.mrb[0].mxu0
        %v478 = vpop.f32.mrb[0].mxu0
        %v479 = vadd.f32 %v306, %v478
        %v480 = vpop.f32.mrb[0].mxu0
        %481 = vdwg.mxu0
        %v482 = vmax.f32 %v420, 0.0
        %v483 = vmax.f32 %v423, 0.0
        %v484 = vmax.f32 %v428, 0.0
        %v485 = vmax.f32 %v431, 0.0
        %v486 = vmax.f32 %v436, 0.0
        %v487 = vmax.f32 %v439, 0.0
        %v488 = vmax.f32 %v444, 0.0
        %v489 = vmax.f32 %v447, 0.0
        %v490 = vmax.f32 %v452, 0.0
        %v491 = vmax.f32 %v455, 0.0
        %v492 = vmax.f32 %v460, 0.0
        %v493 = vmax.f32 %v463, 0.0
        %v494 = vmax.f32 %v468, 0.0
        %v495 = vmax.f32 %v471, 0.0
        %v496 = vmax.f32 %v476, 0.0
        %v497 = vmax.f32 %v479, 0.0
        %v498 = vpack.c.bf16 %v483, %v482
        %v499 = vpack.c.bf16 %v485, %v484
        %v500 = vpack.c.bf16 %v487, %v486
        %v501 = vpack.c.bf16 %v489, %v488
        %v502 = vpack.c.bf16 %v491, %v490
        %v503 = vpack.c.bf16 %v493, %v492
        %v504 = vpack.c.bf16 %v495, %v494
        %v505 = vpack.c.bf16 %v497, %v496
        %v506 = vld [vmem:[%s3] sm:$0xf]
        %v507 = vld [vmem:[%s3 + $0x4] sm:$0xf]
        %v508 = vld [vmem:[%s3 + $0x8] sm:$0xf]
        %v509 = vld [vmem:[%s3 + $0xc] sm:$0xf]
        %v510 = vld [vmem:[%s3 + $0x10] sm:$0xf]
        %v511 = vld [vmem:[%s3 + $0x14] sm:$0xf]
        %v512 = vld [vmem:[%s3 + $0x18] sm:$0xf]
        %v513 = vld [vmem:[%s3 + $0x1c] sm:$0xf]
        %v514 = vld [vmem:[%s3 + $0x20] sm:$0xf]
        %v515 = vld [vmem:[%s3 + $0x24] sm:$0xf]
        %v516 = vld [vmem:[%s3 + $0x28] sm:$0xf]
        %v517 = vld [vmem:[%s3 + $0x2c] sm:$0xf]
        %v518 = vld [vmem:[%s3 + $0x30] sm:$0xf]
        %v519 = vld [vmem:[%s3 + $0x34] sm:$0xf]
        %v520 = vld [vmem:[%s3 + $0x38] sm:$0xf]
        %v521 = vld [vmem:[%s3 + $0x3c] sm:$0xf]
        %v522 = vld [vmem:[%s4] sm:$0x1]
        %v524 = vlaneseq
        %v525 = vshrl.u32 %v524, 7
        %v526 = vsub.s32 0, %v525
        %v527 = vrot.slane %v522, %v526
        %v545 = vunpack.c.l.b16 %v506
        %v546 = vunpack.c.l.b16 %v507
        %v547 = vunpack.c.l.b16 %v508
        %v548 = vunpack.c.l.b16 %v509
        %v549 = vunpack.c.l.b16 %v510
        %v550 = vunpack.c.l.b16 %v511
        %v551 = vunpack.c.l.b16 %v512
        %v552 = vunpack.c.l.b16 %v513
        %v553 = vunpack.c.l.b16 %v514
        %v554 = vunpack.c.l.b16 %v515
        %v555 = vunpack.c.l.b16 %v516
        %v556 = vunpack.c.l.b16 %v517
        %v557 = vunpack.c.l.b16 %v518
        %v558 = vunpack.c.l.b16 %v519
        %v559 = vunpack.c.l.b16 %v520
        %v560 = vunpack.c.l.b16 %v521
        %v561 = vpack.c.b16 %v546, %v545
        %v562 = vpack.c.b16 %v548, %v547
        %v563 = vpack.c.b16 %v550, %v549
        %v564 = vpack.c.b16 %v552, %v551
        %v565 = vpack.c.b16 %v554, %v553
        %v566 = vpack.c.b16 %v556, %v555
        %v567 = vpack.c.b16 %v558, %v557
        %v568 = vpack.c.b16 %v560, %v559
        %577 = vmatprep.subr.bf16.mxu0 0
        %578 = vmatpush1.bf16.msra.mxu0 %v561
        %579 = vmatprep.subr.bf16.mxu0 0
        %580 = vmatpush1.bf16.msra.mxu0 %v562
        %581 = vmatprep.subr.bf16.mxu0 0
        %582 = vmatpush1.bf16.msra.mxu0 %v563
        %583 = vmatprep.subr.bf16.mxu0 0
        %584 = vmatpush1.bf16.msra.mxu0 %v564
        %585 = vmatprep.subr.bf16.mxu0 0
        %586 = vmatpush1.bf16.msra.mxu0 %v565
        %587 = vmatprep.subr.bf16.mxu0 0
        %588 = vmatpush1.bf16.msra.mxu0 %v566
        %589 = vmatprep.subr.bf16.mxu0 0
        %590 = vmatpush1.bf16.msra.mxu0 %v567
        %591 = vmatprep.subr.bf16.mxu0 0
        %592 = vmatpush1.bf16.msra.mxu0 %v568
        %593 = vmatprep.subr.bf16.mxu0 0
        %594 = vmatpush1.bf16.msra.mxu0 0
        %595 = vmatprep.subr.bf16.mxu0 0
        %596 = vmatpush1.bf16.msra.mxu0 0
        %597 = vmatprep.subr.bf16.mxu0 0
        %598 = vmatpush1.bf16.msra.mxu0 0
        %599 = vmatprep.subr.bf16.mxu0 0
        %600 = vmatpush1.bf16.msra.mxu0 0
        %601 = vmatprep.subr.bf16.mxu0 0
        %602 = vmatpush1.bf16.msra.mxu0 0
        %603 = vmatprep.subr.bf16.mxu0 0
        %604 = vmatpush1.bf16.msra.mxu0 0
        %605 = vmatprep.subr.bf16.mxu0 0
        %606 = vmatpush1.bf16.msra.mxu0 0
        %607 = vmatprep.subr.bf16.mxu0 0
        %608 = vmatpush1.bf16.msra.mxu0 0
        %609 = vmatprep.mubr.bf16.mxu0 0
        %610 = vmatmul.mubr.bf16.gmra.mrb[0].mxu0 %v498
        %v611 = vpop.f32.mrb[0].mxu0
        %v612 = vadd.f32 %v527, %v611
        %v613 = vpop.f32.mrb[0].mxu0
        %v614 = vpop.f32.mrb[0].mxu0
        %v615 = vadd.f32 %v527, %v614
        %v616 = vpop.f32.mrb[0].mxu0
        %617 = vmatprep.mubr.bf16.mxu0 0
        %618 = vmatmul.mubr.bf16.gmra.mrb[0].mxu0 %v499
        %v619 = vpop.f32.mrb[0].mxu0
        %v620 = vadd.f32 %v527, %v619
        %v621 = vpop.f32.mrb[0].mxu0
        %v622 = vpop.f32.mrb[0].mxu0
        %v623 = vadd.f32 %v527, %v622
        %v624 = vpop.f32.mrb[0].mxu0
        %625 = vmatprep.mubr.bf16.mxu0 0
        %626 = vmatmul.mubr.bf16.gmra.mrb[0].mxu0 %v500
        %v627 = vpop.f32.mrb[0].mxu0
        %v628 = vadd.f32 %v527, %v627
        %v629 = vpop.f32.mrb[0].mxu0
        %v630 = vpop.f32.mrb[0].mxu0
        %v631 = vadd.f32 %v527, %v630
        %v632 = vpop.f32.mrb[0].mxu0
        %633 = vmatprep.mubr.bf16.mxu0 0
        %634 = vmatmul.mubr.bf16.gmra.mrb[0].mxu0 %v501
        %v635 = vpop.f32.mrb[0].mxu0
        %v636 = vadd.f32 %v527, %v635
        %v637 = vpop.f32.mrb[0].mxu0
        %v638 = vpop.f32.mrb[0].mxu0
        %v639 = vadd.f32 %v527, %v638
        %v640 = vpop.f32.mrb[0].mxu0
        %641 = vmatprep.mubr.bf16.mxu0 0
        %642 = vmatmul.mubr.bf16.gmra.mrb[0].mxu0 %v502
        %v643 = vpop.f32.mrb[0].mxu0
        %v644 = vadd.f32 %v527, %v643
        %v645 = vpop.f32.mrb[0].mxu0
        %v646 = vpop.f32.mrb[0].mxu0
        %v647 = vadd.f32 %v527, %v646
        %v648 = vpop.f32.mrb[0].mxu0
        %649 = vmatprep.mubr.bf16.mxu0 0
        %650 = vmatmul.mubr.bf16.gmra.mrb[0].mxu0 %v503
        %v651 = vpop.f32.mrb[0].mxu0
        %v652 = vadd.f32 %v527, %v651
        %v653 = vpop.f32.mrb[0].mxu0
        %v654 = vpop.f32.mrb[0].mxu0
        %v655 = vadd.f32 %v527, %v654
        %v656 = vpop.f32.mrb[0].mxu0
        %657 = vmatprep.mubr.bf16.mxu0 0
        %658 = vmatmul.mubr.bf16.gmra.mrb[0].mxu0 %v504
        %v659 = vpop.f32.mrb[0].mxu0
        %v660 = vadd.f32 %v527, %v659
        %v661 = vpop.f32.mrb[0].mxu0
        %v662 = vpop.f32.mrb[0].mxu0
        %v663 = vadd.f32 %v527, %v662
        %v664 = vpop.f32.mrb[0].mxu0
        %665 = vmatprep.mubr.bf16.mxu0 0
        %666 = vmatmul.mubr.bf16.gmra.mrb[0].mxu0 %v505
        %v667 = vpop.f32.mrb[0].mxu0
        %v668 = vadd.f32 %v527, %v667
        %v669 = vpop.f32.mrb[0].mxu0
        %v670 = vpop.f32.mrb[0].mxu0
        %v671 = vadd.f32 %v527, %v670
        %v672 = vpop.f32.mrb[0].mxu0
        %673 = vdwg.mxu0
        %v674 = vmax.f32 %v612, 0.0
        %v675 = vmax.f32 %v615, 0.0
        %v676 = vmax.f32 %v620, 0.0
        %v677 = vmax.f32 %v623, 0.0
        %v678 = vmax.f32 %v628, 0.0
        %v679 = vmax.f32 %v631, 0.0
        %v680 = vmax.f32 %v636, 0.0
        %v681 = vmax.f32 %v639, 0.0
        %v682 = vmax.f32 %v644, 0.0
        %v683 = vmax.f32 %v647, 0.0
        %v684 = vmax.f32 %v652, 0.0
        %v685 = vmax.f32 %v655, 0.0
        %v686 = vmax.f32 %v660, 0.0
        %v687 = vmax.f32 %v663, 0.0
        %v688 = vmax.f32 %v668, 0.0
        %v689 = vmax.f32 %v671, 0.0
        %v690 = vpack.c.bf16 %v675, %v674
        %v691 = vpack.c.bf16 %v677, %v676
        %v692 = vpack.c.bf16 %v679, %v678
        %v693 = vpack.c.bf16 %v681, %v680
        %v694 = vpack.c.bf16 %v683, %v682
        %v695 = vpack.c.bf16 %v685, %v684
        %v696 = vpack.c.bf16 %v687, %v686
        %v697 = vpack.c.bf16 %v689, %v688
        %v698 = vld [vmem:[%s5] sm:$0xf]
        %v699 = vld [vmem:[%s5 + $0x4] sm:$0xf]
        %v700 = vld [vmem:[%s5 + $0x8] sm:$0xf]
        %v701 = vld [vmem:[%s5 + $0xc] sm:$0xf]
        %v702 = vld [vmem:[%s5 + $0x10] sm:$0xf]
        %v703 = vld [vmem:[%s5 + $0x14] sm:$0xf]
        %v704 = vld [vmem:[%s5 + $0x18] sm:$0xf]
        %v705 = vld [vmem:[%s5 + $0x1c] sm:$0xf]
        %v706 = vld [vmem:[%s5 + $0x20] sm:$0xf]
        %v707 = vld [vmem:[%s5 + $0x24] sm:$0xf]
        %v708 = vld [vmem:[%s5 + $0x28] sm:$0xf]
        %v709 = vld [vmem:[%s5 + $0x2c] sm:$0xf]
        %v710 = vld [vmem:[%s5 + $0x30] sm:$0xf]
        %v711 = vld [vmem:[%s5 + $0x34] sm:$0xf]
        %v712 = vld [vmem:[%s5 + $0x38] sm:$0xf]
        %v713 = vld [vmem:[%s5 + $0x3c] sm:$0xf]
        %v714 = vld [vmem:[%s6] sm:$0x1]
        %v716 = vlaneseq
        %v717 = vshrl.u32 %v716, 7
        %v718 = vsub.s32 0, %v717
        %v719 = vrot.slane %v714, %v718
        %v737 = vunpack.c.l.b16 %v698
        %v738 = vunpack.c.l.b16 %v699
        %v739 = vunpack.c.l.b16 %v700
        %v740 = vunpack.c.l.b16 %v701
        %v741 = vunpack.c.l.b16 %v702
        %v742 = vunpack.c.l.b16 %v703
        %v743 = vunpack.c.l.b16 %v704
        %v744 = vunpack.c.l.b16 %v705
        %v745 = vunpack.c.l.b16 %v706
        %v746 = vunpack.c.l.b16 %v707
        %v747 = vunpack.c.l.b16 %v708
        %v748 = vunpack.c.l.b16 %v709
        %v749 = vunpack.c.l.b16 %v710
        %v750 = vunpack.c.l.b16 %v711
        %v751 = vunpack.c.l.b16 %v712
        %v752 = vunpack.c.l.b16 %v713
        %v753 = vpack.c.b16 %v738, %v737
        %v754 = vpack.c.b16 %v740, %v739
        %v755 = vpack.c.b16 %v742, %v741
        %v756 = vpack.c.b16 %v744, %v743
        %v757 = vpack.c.b16 %v746, %v745
        %v758 = vpack.c.b16 %v748, %v747
        %v759 = vpack.c.b16 %v750, %v749
        %v760 = vpack.c.b16 %v752, %v751
        %769 = vmatprep.subr.bf16.mxu0 0
        %770 = vmatpush1.bf16.msra.mxu0 %v753
        %771 = vmatprep.subr.bf16.mxu0 0
        %772 = vmatpush1.bf16.msra.mxu0 %v754
        %773 = vmatprep.subr.bf16.mxu0 0
        %774 = vmatpush1.bf16.msra.mxu0 %v755
        %775 = vmatprep.subr.bf16.mxu0 0
        %776 = vmatpush1.bf16.msra.mxu0 %v756
        %777 = vmatprep.subr.bf16.mxu0 0
        %778 = vmatpush1.bf16.msra.mxu0 %v757
        %779 = vmatprep.subr.bf16.mxu0 0
        %780 = vmatpush1.bf16.msra.mxu0 %v758
        %781 = vmatprep.subr.bf16.mxu0 0
        %782 = vmatpush1.bf16.msra.mxu0 %v759
        %783 = vmatprep.subr.bf16.mxu0 0
        %784 = vmatpush1.bf16.msra.mxu0 %v760
        %785 = vmatprep.subr.bf16.mxu0 0
        %786 = vmatpush1.bf16.msra.mxu0 0
        %787 = vmatprep.subr.bf16.mxu0 0
        %788 = vmatpush1.bf16.msra.mxu0 0
        %789 = vmatprep.subr.bf16.mxu0 0
        %790 = vmatpush1.bf16.msra.mxu0 0
        %791 = vmatprep.subr.bf16.mxu0 0
        %792 = vmatpush1.bf16.msra.mxu0 0
        %793 = vmatprep.subr.bf16.mxu0 0
        %794 = vmatpush1.bf16.msra.mxu0 0
        %795 = vmatprep.subr.bf16.mxu0 0
        %796 = vmatpush1.bf16.msra.mxu0 0
        %797 = vmatprep.subr.bf16.mxu0 0
        %798 = vmatpush1.bf16.msra.mxu0 0
        %799 = vmatprep.subr.bf16.mxu0 0
        %800 = vmatpush1.bf16.msra.mxu0 0
        %801 = vmatprep.mubr.bf16.mxu0 0
        %802 = vmatmul.mubr.bf16.gmra.mrb[0].mxu0 %v690
        %v803 = vpop.f32.mrb[0].mxu0
        %v804 = vadd.f32 %v719, %v803
        %v805 = vpop.f32.mrb[0].mxu0
        %v806 = vpop.f32.mrb[0].mxu0
        %v807 = vadd.f32 %v719, %v806
        %v808 = vpop.f32.mrb[0].mxu0
        %809 = vmatprep.mubr.bf16.mxu0 0
        %810 = vmatmul.mubr.bf16.gmra.mrb[0].mxu0 %v691
        %v811 = vpop.f32.mrb[0].mxu0
        %v812 = vadd.f32 %v719, %v811
        %v813 = vpop.f32.mrb[0].mxu0
        %v814 = vpop.f32.mrb[0].mxu0
        %v815 = vadd.f32 %v719, %v814
        %v816 = vpop.f32.mrb[0].mxu0
        %817 = vmatprep.mubr.bf16.mxu0 0
        %818 = vmatmul.mubr.bf16.gmra.mrb[0].mxu0 %v692
        %v819 = vpop.f32.mrb[0].mxu0
        %v820 = vadd.f32 %v719, %v819
        %v821 = vpop.f32.mrb[0].mxu0
        %v822 = vpop.f32.mrb[0].mxu0
        %v823 = vadd.f32 %v719, %v822
        %v824 = vpop.f32.mrb[0].mxu0
        %825 = vmatprep.mubr.bf16.mxu0 0
        %826 = vmatmul.mubr.bf16.gmra.mrb[0].mxu0 %v693
        %v827 = vpop.f32.mrb[0].mxu0
        %v828 = vadd.f32 %v719, %v827
        %v829 = vpop.f32.mrb[0].mxu0
        %v830 = vpop.f32.mrb[0].mxu0
        %v831 = vadd.f32 %v719, %v830
        %v832 = vpop.f32.mrb[0].mxu0
        %833 = vmatprep.mubr.bf16.mxu0 0
        %834 = vmatmul.mubr.bf16.gmra.mrb[0].mxu0 %v694
        %v835 = vpop.f32.mrb[0].mxu0
        %v836 = vadd.f32 %v719, %v835
        %v837 = vpop.f32.mrb[0].mxu0
        %v838 = vpop.f32.mrb[0].mxu0
        %v839 = vadd.f32 %v719, %v838
        %v840 = vpop.f32.mrb[0].mxu0
        %841 = vmatprep.mubr.bf16.mxu0 0
        %842 = vmatmul.mubr.bf16.gmra.mrb[0].mxu0 %v695
        %v843 = vpop.f32.mrb[0].mxu0
        %v844 = vadd.f32 %v719, %v843
        %v845 = vpop.f32.mrb[0].mxu0
        %v846 = vpop.f32.mrb[0].mxu0
        %v847 = vadd.f32 %v719, %v846
        %v848 = vpop.f32.mrb[0].mxu0
        %849 = vmatprep.mubr.bf16.mxu0 0
        %850 = vmatmul.mubr.bf16.gmra.mrb[0].mxu0 %v696
        %v851 = vpop.f32.mrb[0].mxu0
        %v852 = vadd.f32 %v719, %v851
        %v853 = vpop.f32.mrb[0].mxu0
        %v854 = vpop.f32.mrb[0].mxu0
        %v855 = vadd.f32 %v719, %v854
        %v856 = vpop.f32.mrb[0].mxu0
        %857 = vmatprep.mubr.bf16.mxu0 0
        %858 = vmatmul.mubr.bf16.gmra.mrb[0].mxu0 %v697
        %v859 = vpop.f32.mrb[0].mxu0
        %v860 = vadd.f32 %v719, %v859
        %v861 = vpop.f32.mrb[0].mxu0
        %v862 = vpop.f32.mrb[0].mxu0
        %v863 = vadd.f32 %v719, %v862
        %v864 = vpop.f32.mrb[0].mxu0
        %865 = vdwg.mxu0
        %866 = vst [vmem:[%s272] sm:$0xff] %v804
        %867 = vst [vmem:[%s272 + $0x8] sm:$0xff] %v807
        %868 = vst [vmem:[%s272 + $0x10] sm:$0xff] %v812
        %869 = vst [vmem:[%s272 + $0x18] sm:$0xff] %v815
        %870 = vst [vmem:[%s272 + $0x20] sm:$0xff] %v820
        %871 = vst [vmem:[%s272 + $0x28] sm:$0xff] %v823
        %872 = vst [vmem:[%s272 + $0x30] sm:$0xff] %v828
        %873 = vst [vmem:[%s272 + $0x38] sm:$0xff] %v831
        %874 = vst [vmem:[%s272 + $0x40] sm:$0xff] %v836
        %875 = vst [vmem:[%s272 + $0x48] sm:$0xff] %v839
        %876 = vst [vmem:[%s272 + $0x50] sm:$0xff] %v844
        %877 = vst [vmem:[%s272 + $0x58] sm:$0xff] %v847
        %878 = vst [vmem:[%s272 + $0x60] sm:$0xff] %v852
        %879 = vst [vmem:[%s272 + $0x68] sm:$0xff] %v855
        %880 = vst [vmem:[%s272 + $0x70] sm:$0xff] %v860
        %881 = vst [vmem:[%s272 + $0x78] sm:$0xff] %v863
        %s882 = sand.u32 %s181, 1
        %s883 = scalar_lea.sflag [#allocation3], %s882
        %s884 = sand.u32 %s181, 1
        %s885 = smul.addr %s884, 128
        %s886 = scalar_lea.vmem [#allocation2], %s885
        // Predicated region
        $region49: #{tpu_custom_call.1} parent=47 // pred_check
          %p887 = pneg %p191
        $region50: #{tpu_custom_call.1} parent=47 // pred_check_branch
          %889 = sbr.rel (%p887) target = $region52
        $region51: #{tpu_custom_call.1} parent=47 // pred_region
          %s890 = smul.u32 16, %s21
          %s892 = ssub.s32 2048, 2048
          %893 = vsyncadd %s883, %s892
          %s894 = smul.addr %s890, 128
          %s895 = scalar_lea.hbm %s7, %s894
          %s896 = sshll.u32 %s886, 4
          %s897 = int_to_ptr.vmem [resolvable:$true] %s896
          %902 = dma.vmem_to_hbm [thread:$0]  %s897, 2048, %s895, %s883, 128, 128, 8
        $region52: #{tpu_custom_call.1} parent=47 // pred_fallthru
          _
      $region48: #{tpu_custom_call.1} parent=5 // pred_fallthru
        _
      %p903 = scmp.le.s32.totalorder 2, %s16
      // Predicated region
      $region53: #{tpu_custom_call.1} parent=5 // pred_check
        %p904 = pneg %p903
      $region54: #{tpu_custom_call.1} parent=5 // pred_check_branch
        %906 = sbr.rel (%p904) target = $region56
      $region55: #{tpu_custom_call.1} parent=5 // pred_region
        %s907 = ssub.s32 %s16, 2
        // Predicated region
        $region57: #{tpu_custom_call.1} parent=55 // pred_check
          %p908 = pneg %p197
        $region58: #{tpu_custom_call.1} parent=55 // pred_check_branch
          %910 = sbr.rel (%p908) target = $region60
        $region59: #{tpu_custom_call.1} parent=55 // pred_region
          %s911 = sand.u32 %s182, 1
          %s912 = scalar_lea.sflag [#allocation3], %s911
          %s913 = sand.u32 %s182, 1
          %s914 = smul.addr %s913, 128
          %s915 = scalar_lea.vmem [#allocation2], %s914
          %916 = dma.done %s912, 2048
        $region60: #{tpu_custom_call.1} parent=55 // pred_fallthru
          _
      $region56: #{tpu_custom_call.1} parent=5 // pred_fallthru
        _
    $region6: #{tpu_custom_call.1} parent=1 // loop_footer
      %s20 = sadd.s32 1, %s16
    $region7: #{tpu_custom_call.1} parent=1 // loop_footer_branch
      %15 = sbr.rel target = $region3
    $region8: #{tpu_custom_call.1} parent=1 // loop_exit
      _
    %917 = vsyncpa [#allocation3], 1
    %s918 = scalar_lea.sflag [#allocation3], 1
    %919 = vsyncpa %s918, 1

</llo_original>
